<compile_context>
chip_gen: v7x
topology: tpu7x:2x2x1
jax: 0.10.0
libtpu: 0.0.40
codegen_flags: <defaults>
</compile_context>

<pallas_src>
import functools

import jax
import jax.numpy as jnp
from jax.experimental import pallas as pl
from jax.experimental.pallas import tpu as pltpu

EPS = 1e-5  # nn.BatchNorm2d default eps


def _conv_rows(x_slab, w_ref):
    """3x3 conv of one halo slab expressed as three accumulating MXU dots.

    x_slab: (hb+2, D) lane-flattened, spatially padded input rows, D = (W+2)*Cin
    w_ref:  (3, D, L) Toeplitz-expanded conv weights, L = W*Cout
    returns (hb, L) f32 conv output rows (w-major, cout-minor on the lane axis).
    """
    hp, _ = x_slab.shape
    hb = hp - 2
    conv = jnp.dot(x_slab[0:hb, :], w_ref[0], preferred_element_type=jnp.float32)
    conv += jnp.dot(x_slab[1:hb + 1, :], w_ref[1], preferred_element_type=jnp.float32)
    conv += jnp.dot(x_slab[2:hb + 2, :], w_ref[2], preferred_element_type=jnp.float32)
    return conv


def conv_stats_kernel(x_ref, w_ref, stats_ref):
    # x_ref: (1, hb+2, D); w_ref: (3, D, L); stats_ref: (1, 2, L) f32 per-slab partials
    conv = _conv_rows(x_ref[0], w_ref)                       # (hb, L) f32
    s1 = jnp.sum(conv, axis=0, keepdims=True)                # (1, L)
    s2 = jnp.sum(conv * conv, axis=0, keepdims=True)         # (1, L)
    stats_ref[0] = jnp.concatenate([s1, s2], axis=0)


def conv_bn_relu_kernel(x_ref, w_ref, scale_ref, shift_ref, o_ref):
    # x_ref: (1, hb+2, D); scale/shift: (1, L); o_ref: (1, hb, L) f32
    conv = _conv_rows(x_ref[0], w_ref)                       # (hb, L) f32
    o_ref[0] = jnp.maximum(conv * scale_ref[...] + shift_ref[...], 0.0)


def _choose_row_block(H, n_images, slab_row_bytes, target_steps=8, budget_bytes=4 << 20):
    """Largest divisor hb of H whose (hb+2)-row slab fits a ~4 MiB stream budget while the
    grid still has >= target_steps slabs; falls back to the largest budget-fitting divisor."""
    divs = [d for d in range(H, 0, -1) if H % d == 0]
    for hb in divs:
        if (hb + 2) * slab_row_bytes <= budget_bytes and n_images * (H // hb) >= target_steps:
            return hb
    for hb in divs:
        if (hb + 2) * slab_row_bytes <= budget_bytes:
            return hb
    return 1


def conv_batchnorm_relu(x_nchw, w_oihw, bias, gamma, beta, *,
                        compute_dtype=jnp.bfloat16, eps=EPS):
    """x_nchw: (N, Cin, H, W). Returns (N, Cout, H, W), matching PyTorch training-mode forward."""
    # Conv bias is a per-channel constant: training-mode BN's mean subtraction cancels it
    # exactly, so it is dead compute / dead DMA and is not used.
    del bias
    N, Cin, H, W = x_nchw.shape
    Cout = w_oihw.shape[0]
    Wp = W + 2
    D = Wp * Cin                      # natural (unpadded) lane width of one padded row
    L = W * Cout                      # lane-dense output row width (128 for the demo shape)
    f32 = jnp.float32
    dbytes = jnp.dtype(compute_dtype).itemsize

    # ---- layout: NCHW -> NHWC, spatial pad 1, flatten (W+2, Cin) onto lanes ----
    # TODO(synk): fold this transpose/pad (and the final NHWC->NCHW transpose) into the
    # kernels via an in-kernel gather to avoid the extra XLA HBM passes.
    x = jnp.transpose(x_nchw, (0, 2, 3, 1)).astype(f32)
    x = jnp.pad(x, ((0, 0), (1, 1), (1, 1), (0, 0))).reshape(N, H + 2, D)
    x = x.astype(compute_dtype)

    # ---- halo slabs: grid runs over (image, H-row-block); each slab carries its own
    #      2-row halo so BlockSpec blocks never have to overlap ----
    hb = _choose_row_block(H, N, D * dbytes)
    n_hb = H // hb
    S = N * n_hb                                             # grid steps per pass
    row_idx = jnp.arange(n_hb)[:, None] * hb + jnp.arange(hb + 2)[None, :]
    slabs = x[:, row_idx, :].reshape(S, hb + 2, D)           # (S, hb+2, D)

    # ---- Toeplitz-expanded weights: the 3x3 conv becomes three K=D matmuls ----
    w = jnp.transpose(w_oihw, (2, 3, 1, 0)).astype(f32)      # (kh, kw, Cin, Cout)
    # E[kw, w_in, w_out] = 1 iff w_in == w_out + kw
    E = (jnp.arange(Wp)[None, :, None]
         == jnp.arange(W)[None, None, :] + jnp.arange(3)[:, None, None]).astype(f32)
    w_big = jnp.einsum('kpq,akco->apcqo', E, w).reshape(3, D, L).astype(compute_dtype)

    # Per-step VMEM (double-buffered slab in/out + resident weights + f32 temps) stays far
    # below the 32 MiB scoped limit even on v7x; set the limit explicitly anyway.
    cparams = pltpu.CompilerParams(dimension_semantics=("parallel",),
                                   vmem_limit_bytes=32 << 20)
    x_spec = pl.BlockSpec((1, hb + 2, D), lambda i: (i, 0, 0))
    w_spec = pl.BlockSpec((3, D, L), lambda i: (0, 0, 0))
    # TODO(synk): sweep pipeline_mode=pl.Buffered(3) on x_spec once shapes are large enough
    # for DMA latency to show.

    # ---- pass 1: BN statistics only (no conv intermediate written to HBM) ----
    stats = pl.pallas_call(
        conv_stats_kernel,
        out_shape=jax.ShapeDtypeStruct((S, 2, L), f32),
        grid=(S,),
        in_specs=[x_spec, w_spec],
        out_specs=pl.BlockSpec((1, 2, L), lambda i: (i, 0, 0)),
        compiler_params=cparams,
    )(slabs, w_big)

    # ---- tiny reduction: batch statistics -> folded per-channel scale / shift ----
    # TODO(synk): for trained (non-zero-mean) activations switch to a shifted-sum / Welford
    # combine; E[x^2]-E[x]^2 in f32 is adequate for unit-scale inputs.
    s = stats.reshape(S, 2, W, Cout).sum(axis=(0, 2))        # (2, Cout)
    cnt = float(N * H * W)
    mean = s[0] / cnt
    var = s[1] / cnt - mean * mean                           # biased var (training-mode BN)
    scale = gamma.astype(f32) * jax.lax.rsqrt(var + eps)
    shift = beta.astype(f32) - scale * mean
    scale_l = jnp.tile(scale, W).reshape(1, L)               # lane layout w*Cout + co
    shift_l = jnp.tile(shift, W).reshape(1, L)
    # TODO(synk): running_mean/running_var buffer updates (module state) are not produced;
    # if added, running_mean must be computed from conv + bias, not conv.

    # ---- pass 2: recompute conv fused with scale/shift + ReLU (lane-dense stores) ----
    out = pl.pallas_call(
        conv_bn_relu_kernel,
        out_shape=jax.ShapeDtypeStruct((S, hb, L), f32),
        grid=(S,),
        in_specs=[x_spec, w_spec,
                  pl.BlockSpec((1, L), lambda i: (0, 0)),
                  pl.BlockSpec((1, L), lambda i: (0, 0))],
        out_specs=pl.BlockSpec((1, hb, L), lambda i: (i, 0, 0)),
        compiler_params=cparams,
    )(slabs, w_big, scale_l, shift_l)

    out = out.reshape(N, H, W, Cout)
    return jnp.transpose(out, (0, 3, 1, 2))


def reference(x_nchw, w_oihw, bias, gamma, beta):
    out = jax.lax.conv_general_dilated(
        x_nchw, w_oihw, window_strides=(1, 1), padding=((1, 1), (1, 1)),
        dimension_numbers=("NCHW", "OIHW", "NCHW"))
    out = out + bias[None, :, None, None]
    mean = out.mean(axis=(0, 2, 3), keepdims=True)
    var = ((out - mean) ** 2).mean(axis=(0, 2, 3), keepdims=True)
    out = gamma[None, :, None, None] * (out - mean) * jax.lax.rsqrt(var + EPS) \
        + beta[None, :, None, None]
    return jnp.maximum(out, 0.0)


if __name__ == "__main__":
    key = jax.random.PRNGKey(0)
    k_x, k_w, k_b, k_g, k_be = jax.random.split(key, 5)

    N, Cin, Cout, H, W = 2, 4, 8, 16, 16
    x = jax.random.normal(k_x, (N, Cin, H, W), jnp.float32)
    # nn.Conv2d(4, 8, kernel_size=3) parameter shapes; deterministic synthetic init
    fan_in = Cin * 3 * 3
    w_oihw = jax.random.normal(k_w, (Cout, Cin, 3, 3), jnp.float32) / jnp.sqrt(fan_in)
    bias = 0.1 * jax.random.normal(k_b, (Cout,), jnp.float32)
    # nn.BatchNorm2d(8) affine params (default init gamma=1, beta=0; perturb deterministically)
    gamma = 1.0 + 0.1 * jax.random.normal(k_g, (Cout,), jnp.float32)
    beta = 0.1 * jax.random.normal(k_be, (Cout,), jnp.float32)

    ref = reference(x, w_oihw, bias, gamma, beta)

    # Exact-precision path: f32 matmul inputs, tight tolerance vs the f32 reference.
    run_f32 = jax.jit(functools.partial(conv_batchnorm_relu, compute_dtype=jnp.float32))
    out_f32 = jax.block_until_ready(run_f32(x, w_oihw, bias, gamma, beta))
    assert out_f32.shape == (N, Cout, H, W)
    assert jnp.allclose(out_f32, ref, atol=5e-4, rtol=5e-4), "f32 path mismatch vs reference"

    # Perf path: bf16 matmul inputs (halved DMA bytes, native MXU rate), f32 accumulation and
    # f32 BN stats; tolerance reflects bf16 input quantization (~2^-8 relative per operand).
    run_bf16 = jax.jit(functools.partial(conv_batchnorm_relu, compute_dtype=jnp.bfloat16))
    out_bf16 = jax.block_until_ready(run_bf16(x, w_oihw, bias, gamma, beta))
    assert out_bf16.shape == (N, Cout, H, W)
    assert jnp.allclose(out_bf16, ref, atol=5e-2, rtol=5e-2), "bf16 path mismatch vs reference"

    print("KERNEL_OK")
</pallas_src>

<mosaic_0001>
module attributes {stable_mosaic.version = 11 : i64} {
  func.func @conv_stats_kernel(%arg0: i32, %arg1: memref<1x6x72xf32, #tpu.memory_space<vmem>>, %arg2: memref<3x72x128xf32, #tpu.memory_space<vmem>>, %arg3: memref<1x2x128xf32, #tpu.memory_space<vmem>>) attributes {dimension_semantics = [#tpu.dimension_semantics<parallel>], iteration_bounds = array<i64: 8>, scalar_prefetch = 0 : i64, scratch_operands = 0 : i64, tpu.core_type = #tpu.core_type<tc>, window_params = [{transform_indices = @transform_0, window_bounds = array<i64: 1, 6, 72>}, {pipeline_mode = #tpu.pipeline_mode<synchronous>, transform_indices = @transform_1, window_bounds = array<i64: 3, 72, 128>}, {transform_indices = @transform_2, window_bounds = array<i64: 1, 2, 128>}]} {
    %c0 = arith.constant 0 : index
    %c0_0 = arith.constant 0 : index
    %c0_1 = arith.constant 0 : index
    %0 = vector.load %arg1[%c0, %c0_0, %c0_1] : memref<1x6x72xf32, #tpu.memory_space<vmem>>, vector<1x6x72xf32>
    %1 = vector.shape_cast %0 : vector<1x6x72xf32> to vector<6x72xf32>
    %2 = vector.extract_strided_slice %1 {offsets = [0, 0], sizes = [4, 72], strides = [1, 1]} : vector<6x72xf32> to vector<4x72xf32>
    %c0_2 = arith.constant 0 : index
    %c0_3 = arith.constant 0 : index
    %c0_4 = arith.constant 0 : index
    %3 = vector.load %arg2[%c0_2, %c0_3, %c0_4] : memref<3x72x128xf32, #tpu.memory_space<vmem>>, vector<1x72x128xf32>
    %4 = vector.shape_cast %3 : vector<1x72x128xf32> to vector<72x128xf32>
    %cst = arith.constant dense<0.000000e+00> : vector<4x128xf32>
    %5 = tpu.matmul %2, %4, %cst {dimension_numbers = #tpu.dot_dimension_numbers<[1], [0], [0], [1], [0, 0, 1, 1], [], []>} : vector<4x72xf32>, vector<72x128xf32>, vector<4x128xf32> -> vector<4x128xf32>
    %6 = vector.extract_strided_slice %1 {offsets = [1, 0], sizes = [4, 72], strides = [1, 1]} : vector<6x72xf32> to vector<4x72xf32>
    %c1 = arith.constant 1 : index
    %c0_5 = arith.constant 0 : index
    %c0_6 = arith.constant 0 : index
    %7 = vector.load %arg2[%c1, %c0_5, %c0_6] : memref<3x72x128xf32, #tpu.memory_space<vmem>>, vector<1x72x128xf32>
    %8 = vector.shape_cast %7 : vector<1x72x128xf32> to vector<72x128xf32>
    %cst_7 = arith.constant dense<0.000000e+00> : vector<4x128xf32>
    %9 = tpu.matmul %6, %8, %cst_7 {dimension_numbers = #tpu.dot_dimension_numbers<[1], [0], [0], [1], [0, 0, 1, 1], [], []>} : vector<4x72xf32>, vector<72x128xf32>, vector<4x128xf32> -> vector<4x128xf32>
    %10 = arith.addf %5, %9 : vector<4x128xf32>
    %11 = vector.extract_strided_slice %1 {offsets = [2, 0], sizes = [4, 72], strides = [1, 1]} : vector<6x72xf32> to vector<4x72xf32>
    %c2 = arith.constant 2 : index
    %c0_8 = arith.constant 0 : index
    %c0_9 = arith.constant 0 : index
    %12 = vector.load %arg2[%c2, %c0_8, %c0_9] : memref<3x72x128xf32, #tpu.memory_space<vmem>>, vector<1x72x128xf32>
    %13 = vector.shape_cast %12 : vector<1x72x128xf32> to vector<72x128xf32>
    %cst_10 = arith.constant dense<0.000000e+00> : vector<4x128xf32>
    %14 = tpu.matmul %11, %13, %cst_10 {dimension_numbers = #tpu.dot_dimension_numbers<[1], [0], [0], [1], [0, 0, 1, 1], [], []>} : vector<4x72xf32>, vector<72x128xf32>, vector<4x128xf32> -> vector<4x128xf32>
    %15 = arith.addf %10, %14 : vector<4x128xf32>
    %cst_11 = arith.constant dense<0.000000e+00> : vector<128xf32>
    %16 = vector.multi_reduction <add>, %15, %cst_11 [0] : vector<4x128xf32> to vector<128xf32>
    %17 = vector.shape_cast %16 : vector<128xf32> to vector<1x128xf32>
    %18 = arith.mulf %15, %15 : vector<4x128xf32>
    %cst_12 = arith.constant dense<0.000000e+00> : vector<128xf32>
    %19 = vector.multi_reduction <add>, %18, %cst_12 [0] : vector<4x128xf32> to vector<128xf32>
    %20 = vector.shape_cast %19 : vector<128xf32> to vector<1x128xf32>
    %21 = tpu.concatenate %17, %20 in 0 : vector<1x128xf32>, vector<1x128xf32> -> vector<2x128xf32>
    %c0_13 = arith.constant 0 : index
    %c0_14 = arith.constant 0 : index
    %c0_15 = arith.constant 0 : index
    %22 = vector.load %arg3[%c0_13, %c0_14, %c0_15] : memref<1x2x128xf32, #tpu.memory_space<vmem>>, vector<1x2x128xf32>
    %23 = vector.shape_cast %22 : vector<1x2x128xf32> to vector<2x128xf32>
    %24 = vector.shape_cast %21 : vector<2x128xf32> to vector<1x2x128xf32>
    tpu.vector_store %arg3[%c0_13, %c0_14, %c0_15], %24 {strides = array<i32>} : memref<1x2x128xf32, #tpu.memory_space<vmem>>, vector<1x2x128xf32>,
    return
  }
  func.func @transform_0(%arg0: i32) -> (i32, i32, i32) {
    %c0_i32 = arith.constant 0 : i32
    %c0_i32_0 = arith.constant 0 : i32
    %c0_i32_1 = arith.constant 0 : i32
    return %arg0, %c0_i32, %c0_i32_0 : i32, i32, i32
  }
  func.func @transform_1(%arg0: i32) -> (i32, i32, i32) {
    %c0_i32 = arith.constant 0 : i32
    %c0_i32_0 = arith.constant 0 : i32
    %c0_i32_1 = arith.constant 0 : i32
    %c0_i32_2 = arith.constant 0 : i32
    return %c0_i32, %c0_i32_0, %c0_i32_1 : i32, i32, i32
  }
  func.func @transform_2(%arg0: i32) -> (i32, i32, i32) {
    %c0_i32 = arith.constant 0 : i32
    %c0_i32_0 = arith.constant 0 : i32
    %c0_i32_1 = arith.constant 0 : i32
    return %arg0, %c0_i32, %c0_i32_0 : i32, i32, i32
  }
}

module attributes {stable_mosaic.version = 11 : i64} {
  func.func @conv_bn_relu_kernel(%arg0: i32, %arg1: memref<1x6x72xf32, #tpu.memory_space<vmem>>, %arg2: memref<3x72x128xf32, #tpu.memory_space<vmem>>, %arg3: memref<1x128xf32, #tpu.memory_space<vmem>>, %arg4: memref<1x128xf32, #tpu.memory_space<vmem>>, %arg5: memref<1x4x128xf32, #tpu.memory_space<vmem>>) attributes {dimension_semantics = [#tpu.dimension_semantics<parallel>], iteration_bounds = array<i64: 8>, scalar_prefetch = 0 : i64, scratch_operands = 0 : i64, tpu.core_type = #tpu.core_type<tc>, window_params = [{transform_indices = @transform_0, window_bounds = array<i64: 1, 6, 72>}, {pipeline_mode = #tpu.pipeline_mode<synchronous>, transform_indices = @transform_1, window_bounds = array<i64: 3, 72, 128>}, {pipeline_mode = #tpu.pipeline_mode<synchronous>, transform_indices = @transform_2, window_bounds = array<i64: 1, 128>}, {pipeline_mode = #tpu.pipeline_mode<synchronous>, transform_indices = @transform_3, window_bounds = array<i64: 1, 128>}, {transform_indices = @transform_4, window_bounds = array<i64: 1, 4, 128>}]} {
    %c0 = arith.constant 0 : index
    %c0_0 = arith.constant 0 : index
    %c0_1 = arith.constant 0 : index
    %0 = vector.load %arg1[%c0, %c0_0, %c0_1] : memref<1x6x72xf32, #tpu.memory_space<vmem>>, vector<1x6x72xf32>
    %1 = vector.shape_cast %0 : vector<1x6x72xf32> to vector<6x72xf32>
    %2 = vector.extract_strided_slice %1 {offsets = [0, 0], sizes = [4, 72], strides = [1, 1]} : vector<6x72xf32> to vector<4x72xf32>
    %c0_2 = arith.constant 0 : index
    %c0_3 = arith.constant 0 : index
    %c0_4 = arith.constant 0 : index
    %3 = vector.load %arg2[%c0_2, %c0_3, %c0_4] : memref<3x72x128xf32, #tpu.memory_space<vmem>>, vector<1x72x128xf32>
    %4 = vector.shape_cast %3 : vector<1x72x128xf32> to vector<72x128xf32>
    %cst = arith.constant dense<0.000000e+00> : vector<4x128xf32>
    %5 = tpu.matmul %2, %4, %cst {dimension_numbers = #tpu.dot_dimension_numbers<[1], [0], [0], [1], [0, 0, 1, 1], [], []>} : vector<4x72xf32>, vector<72x128xf32>, vector<4x128xf32> -> vector<4x128xf32>
    %6 = vector.extract_strided_slice %1 {offsets = [1, 0], sizes = [4, 72], strides = [1, 1]} : vector<6x72xf32> to vector<4x72xf32>
    %c1 = arith.constant 1 : index
    %c0_5 = arith.constant 0 : index
    %c0_6 = arith.constant 0 : index
    %7 = vector.load %arg2[%c1, %c0_5, %c0_6] : memref<3x72x128xf32, #tpu.memory_space<vmem>>, vector<1x72x128xf32>
    %8 = vector.shape_cast %7 : vector<1x72x128xf32> to vector<72x128xf32>
    %cst_7 = arith.constant dense<0.000000e+00> : vector<4x128xf32>
    %9 = tpu.matmul %6, %8, %cst_7 {dimension_numbers = #tpu.dot_dimension_numbers<[1], [0], [0], [1], [0, 0, 1, 1], [], []>} : vector<4x72xf32>, vector<72x128xf32>, vector<4x128xf32> -> vector<4x128xf32>
    %10 = arith.addf %5, %9 : vector<4x128xf32>
    %11 = vector.extract_strided_slice %1 {offsets = [2, 0], sizes = [4, 72], strides = [1, 1]} : vector<6x72xf32> to vector<4x72xf32>
    %c2 = arith.constant 2 : index
    %c0_8 = arith.constant 0 : index
    %c0_9 = arith.constant 0 : index
    %12 = vector.load %arg2[%c2, %c0_8, %c0_9] : memref<3x72x128xf32, #tpu.memory_space<vmem>>, vector<1x72x128xf32>
    %13 = vector.shape_cast %12 : vector<1x72x128xf32> to vector<72x128xf32>
    %cst_10 = arith.constant dense<0.000000e+00> : vector<4x128xf32>
    %14 = tpu.matmul %11, %13, %cst_10 {dimension_numbers = #tpu.dot_dimension_numbers<[1], [0], [0], [1], [0, 0, 1, 1], [], []>} : vector<4x72xf32>, vector<72x128xf32>, vector<4x128xf32> -> vector<4x128xf32>
    %15 = arith.addf %10, %14 : vector<4x128xf32>
    %c0_11 = arith.constant 0 : index
    %c0_12 = arith.constant 0 : index
    %16 = vector.load %arg3[%c0_11, %c0_12] : memref<1x128xf32, #tpu.memory_space<vmem>>, vector<1x128xf32>
    %17 = vector.broadcast %16 : vector<1x128xf32> to vector<4x128xf32>
    %18 = arith.mulf %15, %17 : vector<4x128xf32>
    %c0_13 = arith.constant 0 : index
    %c0_14 = arith.constant 0 : index
    %19 = vector.load %arg4[%c0_13, %c0_14] : memref<1x128xf32, #tpu.memory_space<vmem>>, vector<1x128xf32>
    %20 = vector.broadcast %19 : vector<1x128xf32> to vector<4x128xf32>
    %21 = arith.addf %18, %20 : vector<4x128xf32>
    %cst_15 = arith.constant 0.000000e+00 : f32
    %22 = vector.broadcast %cst_15 : f32 to vector<4x128xf32>
    %23 = arith.maximumf %21, %22 : vector<4x128xf32>
    %c0_16 = arith.constant 0 : index
    %c0_17 = arith.constant 0 : index
    %c0_18 = arith.constant 0 : index
    %24 = vector.load %arg5[%c0_16, %c0_17, %c0_18] : memref<1x4x128xf32, #tpu.memory_space<vmem>>, vector<1x4x128xf32>
    %25 = vector.shape_cast %24 : vector<1x4x128xf32> to vector<4x128xf32>
    %26 = vector.shape_cast %23 : vector<4x128xf32> to vector<1x4x128xf32>
    tpu.vector_store %arg5[%c0_16, %c0_17, %c0_18], %26 {strides = array<i32>} : memref<1x4x128xf32, #tpu.memory_space<vmem>>, vector<1x4x128xf32>,
    return
  }
  func.func @transform_0(%arg0: i32) -> (i32, i32, i32) {
    %c0_i32 = arith.constant 0 : i32
    %c0_i32_0 = arith.constant 0 : i32
    %c0_i32_1 = arith.constant 0 : i32
    return %arg0, %c0_i32, %c0_i32_0 : i32, i32, i32
  }
  func.func @transform_1(%arg0: i32) -> (i32, i32, i32) {
    %c0_i32 = arith.constant 0 : i32
    %c0_i32_0 = arith.constant 0 : i32
    %c0_i32_1 = arith.constant 0 : i32
    %c0_i32_2 = arith.constant 0 : i32
    return %c0_i32, %c0_i32_0, %c0_i32_1 : i32, i32, i32
  }
  func.func @transform_2(%arg0: i32) -> (i32, i32) {
    %c0_i32 = arith.constant 0 : i32
    %c0_i32_0 = arith.constant 0 : i32
    %c0_i32_1 = arith.constant 0 : i32
    return %c0_i32, %c0_i32_0 : i32, i32
  }
  func.func @transform_3(%arg0: i32) -> (i32, i32) {
    %c0_i32 = arith.constant 0 : i32
    %c0_i32_0 = arith.constant 0 : i32
    %c0_i32_1 = arith.constant 0 : i32
    return %c0_i32, %c0_i32_0 : i32, i32
  }
  func.func @transform_4(%arg0: i32) -> (i32, i32, i32) {
    %c0_i32 = arith.constant 0 : i32
    %c0_i32_0 = arith.constant 0 : i32
    %c0_i32_1 = arith.constant 0 : i32
    return %arg0, %c0_i32, %c0_i32_0 : i32, i32, i32
  }
}

</mosaic_0001>

<llo_original>
// kernel: tile.13
$region0: #{tile.13}
  #allocation0 [shape = 's32[1]{0}', space=sflag, size = 0x4, scoped, tag = 'scoped memory for tile.13']
  %s0 = inlined_call_operand.vmem [shape: f32[8], index: 0, kind: input, shape index: {}]
  %s1 = inlined_call_operand.vmem [shape: f32[16,8], index: 1, kind: output, shape index: {}]
  // Predicated region
  $region2: #{tile.13} parent=0 // pred_check
    _
  $region3: #{tile.13} parent=0 // pred_check_branch
    %3 = sbr.rel (0) target = $region5
  $region4: #{tile.13} parent=0 // pred_region
    _
  $region5: #{tile.13} parent=0 // pred_fallthru
    _
  %v4 = vld [vmem:[%s0] ss:$0 sm:$0xff]
  %5 = vst [vmem:[%s1] sm:$0xff] %v4
  %s6 = scalar_lea.vmem %s1, 8
  %7 = vst [vmem:[%s6] sm:$0xff] %v4

// kernel: tile.14
$region0: #{tile.14}
  %s0 = inlined_call_operand.vmem [shape: f32[16,8], index: 0, kind: input, shape index: {}]
  %s1 = inlined_call_operand.vmem [shape: f32[1,128], index: 1, kind: output, shape index: {}]
  $region1: #{tile.14} parent=0
    #allocation0 [shape = 'u8[4096]{0}', space=vmem, size = 0x1000, scoped, tag = 'scoped mem for output reshape']
    %v2 = vld [vmem:[%s0] sm:$0x1]
    %vm3 = vcmask 64512
    %4 = vst.msk [vmem:[#allocation0] sm:$0x1] %vm3, %v2
    %s5 = scalar_lea.vmem %s0, 15
    %v6 = vld [vmem:[%s5] sm:$0x1]
    %7 = vrot.lane.b32.xlu0 %v6, 120
    %v8 = vpop.permute.xlu0 %7
    %vm9 = vcmask 1048512
    %10 = vst.msk [vmem:[#allocation0] sm:$0x1] %vm9, %v8
    %s11 = scalar_lea.vmem %s0, 14
    %v12 = vld [vmem:[%s11] sm:$0x1]
    %13 = vrot.lane.b32.xlu0 %v12, 112
    %v14 = vpop.permute.xlu0 %13
    %vm15 = vcmask 982912
    %16 = vst.msk [vmem:[#allocation0] sm:$0x1] %vm15, %v14
    %s17 = scalar_lea.vmem %s0, 13
    %v18 = vld [vmem:[%s17] sm:$0x1]
    %19 = vrot.lane.b32.xlu0 %v18, 104
    %v20 = vpop.permute.xlu0 %19
    %vm21 = vcmask 917312
    %22 = vst.msk [vmem:[#allocation0] sm:$0x1] %vm21, %v20
    %s23 = scalar_lea.vmem %s0, 12
    %v24 = vld [vmem:[%s23] sm:$0x1]
    %25 = vrot.lane.b32.xlu0 %v24, 96
    %v26 = vpop.permute.xlu0 %25
    %vm27 = vcmask 851712
    %28 = vst.msk [vmem:[#allocation0] sm:$0x1] %vm27, %v26
    %s29 = scalar_lea.vmem %s0, 11
    %v30 = vld [vmem:[%s29] sm:$0x1]
    %31 = vrot.lane.b32.xlu0 %v30, 88
    %v32 = vpop.permute.xlu0 %31
    %vm33 = vcmask 786112
    %34 = vst.msk [vmem:[#allocation0] sm:$0x1] %vm33, %v32
    %s35 = scalar_lea.vmem %s0, 10
    %v36 = vld [vmem:[%s35] sm:$0x1]
    %37 = vrot.lane.b32.xlu0 %v36, 80
    %v38 = vpop.permute.xlu0 %37
    %vm39 = vcmask 720512
    %40 = vst.msk [vmem:[#allocation0] sm:$0x1] %vm39, %v38
    %s41 = scalar_lea.vmem %s0, 9
    %v42 = vld [vmem:[%s41] sm:$0x1]
    %43 = vrot.lane.b32.xlu0 %v42, 72
    %v44 = vpop.permute.xlu0 %43
    %vm45 = vcmask 654912
    %46 = vst.msk [vmem:[#allocation0] sm:$0x1] %vm45, %v44
    %s47 = scalar_lea.vmem %s0, 8
    %v48 = vld [vmem:[%s47] sm:$0x1]
    %49 = vrot.lane.b32.xlu0 %v48, 64
    %v50 = vpop.permute.xlu0 %49
    %vm51 = vcmask 589312
    %52 = vst.msk [vmem:[#allocation0] sm:$0x1] %vm51, %v50
    %s53 = scalar_lea.vmem %s0, 7
    %v54 = vld [vmem:[%s53] sm:$0x1]
    %55 = vrot.lane.b32.xlu0 %v54, 56
    %v56 = vpop.permute.xlu0 %55
    %vm57 = vcmask 523712
    %58 = vst.msk [vmem:[#allocation0] sm:$0x1] %vm57, %v56
    %s59 = scalar_lea.vmem %s0, 6
    %v60 = vld [vmem:[%s59] sm:$0x1]
    %61 = vrot.lane.b32.xlu0 %v60, 48
    %v62 = vpop.permute.xlu0 %61
    %vm63 = vcmask 458112
    %64 = vst.msk [vmem:[#allocation0] sm:$0x1] %vm63, %v62
    %s65 = scalar_lea.vmem %s0, 5
    %v66 = vld [vmem:[%s65] sm:$0x1]
    %67 = vrot.lane.b32.xlu0 %v66, 40
    %v68 = vpop.permute.xlu0 %67
    %vm69 = vcmask 392512
    %70 = vst.msk [vmem:[#allocation0] sm:$0x1] %vm69, %v68
    %s71 = scalar_lea.vmem %s0, 4
    %v72 = vld [vmem:[%s71] sm:$0x1]
    %73 = vrot.lane.b32.xlu0 %v72, 32
    %v74 = vpop.permute.xlu0 %73
    %vm75 = vcmask 326912
    %76 = vst.msk [vmem:[#allocation0] sm:$0x1] %vm75, %v74
    %s77 = scalar_lea.vmem %s0, 3
    %v78 = vld [vmem:[%s77] sm:$0x1]
    %79 = vrot.lane.b32.xlu0 %v78, 24
    %v80 = vpop.permute.xlu0 %79
    %vm81 = vcmask 261312
    %82 = vst.msk [vmem:[#allocation0] sm:$0x1] %vm81, %v80
    %s83 = scalar_lea.vmem %s0, 2
    %v84 = vld [vmem:[%s83] sm:$0x1]
    %85 = vrot.lane.b32.xlu0 %v84, 16
    %v86 = vpop.permute.xlu0 %85
    %vm87 = vcmask 195712
    %88 = vst.msk [vmem:[#allocation0] sm:$0x1] %vm87, %v86
    %s89 = scalar_lea.vmem %s0, 1
    %v90 = vld [vmem:[%s89] sm:$0x1]
    %91 = vrot.lane.b32.xlu0 %v90, 8
    %v92 = vpop.permute.xlu0 %91
    %vm93 = vcmask 130112
    %94 = vst.msk [vmem:[#allocation0] sm:$0x1] %vm93, %v92
    %s96 = sshllo.u32 0, 1
    %v98 = vld [vmem:[#allocation0] sm:%s96]
    %s99 = sshllo.u32 0, 1
    %100 = vst [vmem:[%s1] sm:%s99] %v98

// kernel: conv_batchnorm_relu.2
$region0: #{conv_batchnorm_relu.2}
  #allocation0 [shape = 'u32[]', space=smem, size = 0x4, offset = 0x4, fixed_abs, tag = 'smem constant byte address 0x4 - core index']
  #allocation1 [shape = 'u32[144,128]{1,0:T(1,128)}', space=vmem, size = 0x12000, scoped, tag = 'internal scratch']
  %s0 = inlined_call_operand.vmem [shape: f32[8,6,72], index: 0, kind: input, shape index: {}]
  %s1 = inlined_call_operand.vmem [shape: f32[3,72,128], index: 1, kind: input, shape index: {}]
  %s2 = inlined_call_operand.vmem [shape: f32[8,2,128], index: 2, kind: output, shape index: {}]
  %s3 = sld [smem:[#allocation0]]
  $region41: #{conv_batchnorm_relu.2} parent=0
    _
  %s5 = ssub.s32 1, %s3
  %s6 = scalar_select 0, %s5, %s3
  loop: start=0, step=1, limit=10
  $region2: #{conv_batchnorm_relu.2} parent=0 // loop_pre_header
    _
  $region3: #{conv_batchnorm_relu.2} parent=0 // loop_header
    %s8 = sphi 0, %s12
    %p9 = scmp.ge.s32.totalorder %s8, 10
    %s18 = sphi 0, %s20
    %s21 = sphi 0, %s18
    %s22 = sphi 0, %s21
    %s38 = sphi 0, %s22
    %s42 = sphi 0, %s42
    %s44 = sphi 0, %s42
    %s45 = sphi 0, %s44
    %s59 = sphi 0, %s45
    %s65 = sphi 0, %s67
    %s68 = sphi 0, %s65
    %s69 = sphi 0, %s68
    %s85 = sphi 0, %s69
  $region4: #{conv_batchnorm_relu.2} parent=0 // loop_header_branch
    %11 = sbr.rel (%p9) target = $region8
  $region5: #{conv_batchnorm_relu.2} parent=0 // loop_body
    %s13 = ssub.s32 %s8, 1
    %s14 = ssub.s32 %s8, 2
    %s15 = sadd.s32 %s8, 1
    %s16 = ssub.s32 %s8, %s15
    %p17 = scmp.eq.s32.totalorder %s16, 0
    %s19 = sadd.s32 %s18, 1
    %s20 = scalar_select %p17, %s18, %s19
    %p23 = pneg %p17
    %p24 = scmp.eq.s32.totalorder %s8, 7
    %p25 = por %p23, %p24
    %p26 = scmp.ne.s32.totalorder %s18, %s21
    %p27 = scmp.eq.s32.totalorder %s8, 0
    %p28 = por %p26, %p27
    %p29 = scmp.ne.s32.totalorder %s18, %s21
    %p30 = scmp.eq.s32.totalorder %s13, 7
    %p31 = por %p29, %p30
    %p32 = scmp.ne.s32.totalorder %s21, %s22
    %p33 = scmp.eq.s32.totalorder %s13, 0
    %p34 = por %p32, %p33
    %p35 = scmp.ne.s32.totalorder %s21, %s22
    %p36 = scmp.eq.s32.totalorder %s14, 7
    %p37 = por %p35, %p36
    %p39 = scmp.ne.s32.totalorder %s22, %s38
    %p40 = scmp.eq.s32.totalorder %s14, 0
    %p41 = por %p39, %p40
    %s43 = sadd.s32 %s42, 1
    %p46 = scmp.eq.s32.totalorder %s8, 7
    %p47 = scmp.ne.s32.totalorder %s42, %s44
    %p48 = scmp.eq.s32.totalorder %s8, 0
    %p49 = por %p47, %p48
    %p50 = scmp.ne.s32.totalorder %s42, %s44
    %p51 = scmp.eq.s32.totalorder %s13, 7
    %p52 = por %p50, %p51
    %p53 = scmp.ne.s32.totalorder %s44, %s45
    %p54 = scmp.eq.s32.totalorder %s13, 0
    %p55 = por %p53, %p54
    %p56 = scmp.ne.s32.totalorder %s44, %s45
    %p57 = scmp.eq.s32.totalorder %s14, 7
    %p58 = por %p56, %p57
    %p60 = scmp.ne.s32.totalorder %s45, %s59
    %p61 = scmp.eq.s32.totalorder %s14, 0
    %p62 = por %p60, %p61
    %s63 = ssub.s32 %s8, %s15
    %p64 = scmp.eq.s32.totalorder %s63, 0
    %s66 = sadd.s32 %s65, 1
    %s67 = scalar_select %p64, %s65, %s66
    %p70 = pneg %p64
    %p71 = scmp.eq.s32.totalorder %s8, 7
    %p72 = por %p70, %p71
    %p73 = scmp.ne.s32.totalorder %s65, %s68
    %p74 = scmp.eq.s32.totalorder %s8, 0
    %p75 = por %p73, %p74
    %p76 = scmp.ne.s32.totalorder %s65, %s68
    %p77 = scmp.eq.s32.totalorder %s13, 7
    %p78 = por %p76, %p77
    %p79 = scmp.ne.s32.totalorder %s68, %s69
    %p80 = scmp.eq.s32.totalorder %s13, 0
    %p81 = por %p79, %p80
    %p82 = scmp.ne.s32.totalorder %s68, %s69
    %p83 = scmp.eq.s32.totalorder %s14, 7
    %p84 = por %p82, %p83
    %p86 = scmp.ne.s32.totalorder %s69, %s85
    %p87 = scmp.eq.s32.totalorder %s14, 0
    %p88 = por %p86, %p87
    %p89 = scmp.le.s32.totalorder 1, %s8
    %p90 = scmp.lt.s32.totalorder %s8, 9
    %p91 = pnand %p89, %p90
    %p92 = pneg %p91
    // Predicated region
    $region9: #{conv_batchnorm_relu.2} parent=5 // pred_check
      _
    $region10: #{conv_batchnorm_relu.2} parent=5 // pred_check_branch
      %94 = sbr.rel (%p91) target = $region12
    $region11: #{conv_batchnorm_relu.2} parent=5 // pred_region
      %s95 = ssub.s32 %s8, 1
      // Predicated region
      $region13: #{conv_batchnorm_relu.2} parent=11 // pred_check
        %p96 = pneg %p55
      $region14: #{conv_batchnorm_relu.2} parent=11 // pred_check_branch
        %98 = sbr.rel (%p96) target = $region16
      $region15: #{conv_batchnorm_relu.2} parent=11 // pred_region
        _
      $region16: #{conv_batchnorm_relu.2} parent=11 // pred_fallthru
        _
    $region12: #{conv_batchnorm_relu.2} parent=5 // pred_fallthru
      _
    %p99 = scmp.lt.s32.totalorder %s8, 8
    // Predicated region
    $region17: #{conv_batchnorm_relu.2} parent=5 // pred_check
      %p100 = pneg %p99
    $region18: #{conv_batchnorm_relu.2} parent=5 // pred_check_branch
      %102 = sbr.rel (%p100) target = $region20
    $region19: #{conv_batchnorm_relu.2} parent=5 // pred_region
      // Predicated region
      $region21: #{conv_batchnorm_relu.2} parent=19 // pred_check
        %p103 = pneg %p28
      $region22: #{conv_batchnorm_relu.2} parent=19 // pred_check_branch
        %105 = sbr.rel (%p103) target = $region24
      $region23: #{conv_batchnorm_relu.2} parent=19 // pred_region
        %p106 = scmp.lt.s32.totalorder %s8, 7
        %s107 = scalar_select %p106, %s8, 7
        %s108 = smul.addr %s107, 8
        %s109 = scalar_lea.vmem %s0, %s108
      $region24: #{conv_batchnorm_relu.2} parent=19 // pred_fallthru
        _
    $region20: #{conv_batchnorm_relu.2} parent=5 // pred_fallthru
      _
    %p110 = scmp.le.s32.totalorder 1, %s8
    %p111 = scmp.lt.s32.totalorder %s8, 9
    %p112 = pnand %p110, %p111
    %p113 = pneg %p112
    // Predicated region
    $region25: #{conv_batchnorm_relu.2} parent=5 // pred_check
      _
    $region26: #{conv_batchnorm_relu.2} parent=5 // pred_check_branch
      %115 = sbr.rel (%p112) target = $region28
    $region27: #{conv_batchnorm_relu.2} parent=5 // pred_region
      %s116 = ssub.s32 %s8, 1
      %p117 = scmp.lt.s32.totalorder %s13, 7
      %s118 = scalar_select %p117, %s13, 7
      %s119 = smul.addr %s118, 8
      %s120 = scalar_lea.vmem %s0, %s119
      %p121 = pneg %p34
      %p122 = pneg %p31
      %p123 = pneg %p55
      %p124 = pneg %p52
      %p125 = pneg %p81
      %p126 = pneg %p78
      %p127 = scmp.lt.s32.totalorder %s13, 7
      %s128 = scalar_select %p127, %s13, 7
      %s129 = smul.addr %s128, 2
      %s130 = scalar_lea.vmem %s2, %s129
      %p131 = scmp.lt.s32.totalorder %s13, 7
      %s132 = scalar_select %p131, %s13, 7
      %s133 = smul.addr %s132, 8
      %s134 = scalar_lea.vmem %s0, %s133
      %p135 = scmp.lt.s32.totalorder %s13, 7
      %s136 = scalar_select %p135, %s13, 7
      %s137 = smul.addr %s136, 2
      %s138 = scalar_lea.vmem %s2, %s137
      %v139 = vld [vmem:[%s134] sm:$0x3f]
      %v140 = vld [vmem:[%s1] sm:$0xff]
      %v141 = vld [vmem:[%s1 + $0x8] sm:$0xff]
      %v142 = vld [vmem:[%s1 + $0x10] sm:$0xff]
      %v143 = vld [vmem:[%s1 + $0x18] sm:$0xff]
      %v144 = vld [vmem:[%s1 + $0x20] sm:$0xff]
      %v145 = vld [vmem:[%s1 + $0x28] sm:$0xff]
      %v146 = vld [vmem:[%s1 + $0x30] sm:$0xff]
      %v147 = vld [vmem:[%s1 + $0x38] sm:$0xff]
      %v148 = vld [vmem:[%s1 + $0x40] sm:$0xff]
      %s149 = scalar_lea.vmem %s1, 72
      %v150 = vld [vmem:[%s149] sm:$0xff]
      %v151 = vld [vmem:[%s149 + $0x8] sm:$0xff]
      %v152 = vld [vmem:[%s149 + $0x10] sm:$0xff]
      %v153 = vld [vmem:[%s149 + $0x18] sm:$0xff]
      %v154 = vld [vmem:[%s149 + $0x20] sm:$0xff]
      %v155 = vld [vmem:[%s149 + $0x28] sm:$0xff]
      %v156 = vld [vmem:[%s149 + $0x30] sm:$0xff]
      %v157 = vld [vmem:[%s149 + $0x38] sm:$0xff]
      %v158 = vld [vmem:[%s149 + $0x40] sm:$0xff]
      %v160 = vrot.slane %v139, 1
      %vm161 = vcmask 588800
      %v162 = vsel %vm161, %v160, 0
      %164 = vmatprep.subr.mxu0 0.0
      %165 = vmatpush1.msra.mxu0 %v150
      %166 = vmatprep.subr.mxu0 0.0
      %167 = vmatpush1.msra.mxu0 %v151
      %168 = vmatprep.subr.mxu0 0.0
      %169 = vmatpush1.msra.mxu0 %v152
      %170 = vmatprep.subr.mxu0 0.0
      %171 = vmatpush1.msra.mxu0 %v153
      %172 = vmatprep.subr.mxu0 0.0
      %173 = vmatpush1.msra.mxu0 %v154
      %174 = vmatprep.subr.mxu0 0.0
      %175 = vmatpush1.msra.mxu0 %v155
      %176 = vmatprep.subr.mxu0 0.0
      %177 = vmatpush1.msra.mxu0 %v156
      %178 = vmatprep.subr.mxu0 0.0
      %179 = vmatpush1.msra.mxu0 %v157
      %180 = vmatprep.subr.mxu0 0.0
      %181 = vmatpush1.msra.mxu0 %v158
      %182 = vmatprep.subr.mxu0 0.0
      %183 = vmatpush1.msra.mxu0 0.0
      %184 = vmatprep.subr.mxu0 0.0
      %185 = vmatpush1.msra.mxu0 0.0
      %186 = vmatprep.subr.mxu0 0.0
      %187 = vmatpush1.msra.mxu0 0.0
      %188 = vmatprep.subr.mxu0 0.0
      %189 = vmatpush1.msra.mxu0 0.0
      %190 = vmatprep.subr.mxu0 0.0
      %191 = vmatpush1.msra.mxu0 0.0
      %192 = vmatprep.subr.mxu0 0.0
      %193 = vmatpush1.msra.mxu0 0.0
      %194 = vmatprep.subr.mxu0 0.0
      %195 = vmatpush1.msra.mxu0 0.0
      %196 = vmatprep.subr.mxu0 0.0
      %197 = vmatpush1.msra.mxu0 0.0
      %198 = vmatprep.subr.mxu0 0.0
      %199 = vmatpush1.msra.mxu0 0.0
      %200 = vmatprep.subr.mxu0 0.0
      %201 = vmatpush1.msra.mxu0 0.0
      %202 = vmatprep.subr.mxu0 0.0
      %203 = vmatpush1.msra.mxu0 0.0
      %204 = vmatprep.subr.mxu0 0.0
      %205 = vmatpush1.msra.mxu0 0.0
      %206 = vmatprep.subr.mxu0 0.0
      %207 = vmatpush1.msra.mxu0 0.0
      %208 = vmatprep.subr.mxu0 0.0
      %209 = vmatpush1.msra.mxu0 0.0
      %210 = vmatprep.subr.mxu0 0.0
      %211 = vmatpush1.msra.mxu0 0.0
      %212 = vmatprep.subr.mxu0 0.0
      %213 = vmatpush1.msra.mxu0 0.0
      %214 = vmatprep.subr.mxu0 0.0
      %215 = vmatpush1.msra.mxu0 0.0
      %216 = vmatprep.subr.mxu0 0.0
      %217 = vmatpush1.msra.mxu0 0.0
      %218 = vmatprep.subr.mxu0 0.0
      %219 = vmatpush1.msra.mxu0 0.0
      %220 = vmatprep.subr.mxu0 0.0
      %221 = vmatpush1.msra.mxu0 0.0
      %222 = vmatprep.subr.mxu0 0.0
      %223 = vmatpush1.msra.mxu0 0.0
      %224 = vmatprep.subr.mxu0 0.0
      %225 = vmatpush1.msra.mxu0 0.0
      %226 = vmatprep.subr.mxu0 0.0
      %227 = vmatpush1.msra.mxu0 0.0
      %228 = vmatprep.mubr.f32.mxu0 0.0
      %229 = vmatmul.mubr.f32.gmra.mrb[0].mxu0 %v162
      %v230 = vpop.f32.mrb[0].mxu0
      %v231 = vadd.f32 0.0, %v230
      %v232 = vpop.f32.mrb[0].mxu0
      %233 = vdwg.mxu0
      %v234 = vsel %vm161, %v139, 0
      %236 = vmatprep.subr.mxu0 0.0
      %237 = vmatpush1.msra.mxu0 %v140
      %238 = vmatprep.subr.mxu0 0.0
      %239 = vmatpush1.msra.mxu0 %v141
      %240 = vmatprep.subr.mxu0 0.0
      %241 = vmatpush1.msra.mxu0 %v142
      %242 = vmatprep.subr.mxu0 0.0
      %243 = vmatpush1.msra.mxu0 %v143
      %244 = vmatprep.subr.mxu0 0.0
      %245 = vmatpush1.msra.mxu0 %v144
      %246 = vmatprep.subr.mxu0 0.0
      %247 = vmatpush1.msra.mxu0 %v145
      %248 = vmatprep.subr.mxu0 0.0
      %249 = vmatpush1.msra.mxu0 %v146
      %250 = vmatprep.subr.mxu0 0.0
      %251 = vmatpush1.msra.mxu0 %v147
      %252 = vmatprep.subr.mxu0 0.0
      %253 = vmatpush1.msra.mxu0 %v148
      %254 = vmatprep.subr.mxu0 0.0
      %255 = vmatpush1.msra.mxu0 0.0
      %256 = vmatprep.subr.mxu0 0.0
      %257 = vmatpush1.msra.mxu0 0.0
      %258 = vmatprep.subr.mxu0 0.0
      %259 = vmatpush1.msra.mxu0 0.0
      %260 = vmatprep.subr.mxu0 0.0
      %261 = vmatpush1.msra.mxu0 0.0
      %262 = vmatprep.subr.mxu0 0.0
      %263 = vmatpush1.msra.mxu0 0.0
      %264 = vmatprep.subr.mxu0 0.0
      %265 = vmatpush1.msra.mxu0 0.0
      %266 = vmatprep.subr.mxu0 0.0
      %267 = vmatpush1.msra.mxu0 0.0
      %268 = vmatprep.subr.mxu0 0.0
      %269 = vmatpush1.msra.mxu0 0.0
      %270 = vmatprep.subr.mxu0 0.0
      %271 = vmatpush1.msra.mxu0 0.0
      %272 = vmatprep.subr.mxu0 0.0
      %273 = vmatpush1.msra.mxu0 0.0
      %274 = vmatprep.subr.mxu0 0.0
      %275 = vmatpush1.msra.mxu0 0.0
      %276 = vmatprep.subr.mxu0 0.0
      %277 = vmatpush1.msra.mxu0 0.0
      %278 = vmatprep.subr.mxu0 0.0
      %279 = vmatpush1.msra.mxu0 0.0
      %280 = vmatprep.subr.mxu0 0.0
      %281 = vmatpush1.msra.mxu0 0.0
      %282 = vmatprep.subr.mxu0 0.0
      %283 = vmatpush1.msra.mxu0 0.0
      %284 = vmatprep.subr.mxu0 0.0
      %285 = vmatpush1.msra.mxu0 0.0
      %286 = vmatprep.subr.mxu0 0.0
      %287 = vmatpush1.msra.mxu0 0.0
      %288 = vmatprep.subr.mxu0 0.0
      %289 = vmatpush1.msra.mxu0 0.0
      %290 = vmatprep.subr.mxu0 0.0
      %291 = vmatpush1.msra.mxu0 0.0
      %292 = vmatprep.subr.mxu0 0.0
      %293 = vmatpush1.msra.mxu0 0.0
      %294 = vmatprep.subr.mxu0 0.0
      %295 = vmatpush1.msra.mxu0 0.0
      %296 = vmatprep.subr.mxu0 0.0
      %297 = vmatpush1.msra.mxu0 0.0
      %298 = vmatprep.subr.mxu0 0.0
      %299 = vmatpush1.msra.mxu0 0.0
      %300 = vmatprep.mubr.f32.mxu0 0.0
      %301 = vmatmul.mubr.f32.gmra.mrb[0].mxu0 %v234
      %v302 = vpop.f32.mrb[0].mxu0
      %v303 = vadd.f32 %v231, %v302
      %v304 = vpop.f32.mrb[0].mxu0
      %305 = vdwg.mxu0
      %s306 = scalar_lea.vmem %s1, 144
      %v307 = vld [vmem:[%s306] sm:$0xff]
      %v308 = vld [vmem:[%s306 + $0x8] sm:$0xff]
      %v309 = vld [vmem:[%s306 + $0x10] sm:$0xff]
      %v310 = vld [vmem:[%s306 + $0x18] sm:$0xff]
      %v311 = vld [vmem:[%s306 + $0x20] sm:$0xff]
      %v312 = vld [vmem:[%s306 + $0x28] sm:$0xff]
      %v313 = vld [vmem:[%s306 + $0x30] sm:$0xff]
      %v314 = vld [vmem:[%s306 + $0x38] sm:$0xff]
      %v315 = vld [vmem:[%s306 + $0x40] sm:$0xff]
      %v316 = vrot.slane %v139, 2
      %v317 = vsel %vm161, %v316, 0
      %319 = vmatprep.subr.mxu0 0.0
      %320 = vmatpush1.msra.mxu0 %v307
      %321 = vmatprep.subr.mxu0 0.0
      %322 = vmatpush1.msra.mxu0 %v308
      %323 = vmatprep.subr.mxu0 0.0
      %324 = vmatpush1.msra.mxu0 %v309
      %325 = vmatprep.subr.mxu0 0.0
      %326 = vmatpush1.msra.mxu0 %v310
      %327 = vmatprep.subr.mxu0 0.0
      %328 = vmatpush1.msra.mxu0 %v311
      %329 = vmatprep.subr.mxu0 0.0
      %330 = vmatpush1.msra.mxu0 %v312
      %331 = vmatprep.subr.mxu0 0.0
      %332 = vmatpush1.msra.mxu0 %v313
      %333 = vmatprep.subr.mxu0 0.0
      %334 = vmatpush1.msra.mxu0 %v314
      %335 = vmatprep.subr.mxu0 0.0
      %336 = vmatpush1.msra.mxu0 %v315
      %337 = vmatprep.subr.mxu0 0.0
      %338 = vmatpush1.msra.mxu0 0.0
      %339 = vmatprep.subr.mxu0 0.0
      %340 = vmatpush1.msra.mxu0 0.0
      %341 = vmatprep.subr.mxu0 0.0
      %342 = vmatpush1.msra.mxu0 0.0
      %343 = vmatprep.subr.mxu0 0.0
      %344 = vmatpush1.msra.mxu0 0.0
      %345 = vmatprep.subr.mxu0 0.0
      %346 = vmatpush1.msra.mxu0 0.0
      %347 = vmatprep.subr.mxu0 0.0
      %348 = vmatpush1.msra.mxu0 0.0
      %349 = vmatprep.subr.mxu0 0.0
      %350 = vmatpush1.msra.mxu0 0.0
      %351 = vmatprep.subr.mxu0 0.0
      %352 = vmatpush1.msra.mxu0 0.0
      %353 = vmatprep.subr.mxu0 0.0
      %354 = vmatpush1.msra.mxu0 0.0
      %355 = vmatprep.subr.mxu0 0.0
      %356 = vmatpush1.msra.mxu0 0.0
      %357 = vmatprep.subr.mxu0 0.0
      %358 = vmatpush1.msra.mxu0 0.0
      %359 = vmatprep.subr.mxu0 0.0
      %360 = vmatpush1.msra.mxu0 0.0
      %361 = vmatprep.subr.mxu0 0.0
      %362 = vmatpush1.msra.mxu0 0.0
      %363 = vmatprep.subr.mxu0 0.0
      %364 = vmatpush1.msra.mxu0 0.0
      %365 = vmatprep.subr.mxu0 0.0
      %366 = vmatpush1.msra.mxu0 0.0
      %367 = vmatprep.subr.mxu0 0.0
      %368 = vmatpush1.msra.mxu0 0.0
      %369 = vmatprep.subr.mxu0 0.0
      %370 = vmatpush1.msra.mxu0 0.0
      %371 = vmatprep.subr.mxu0 0.0
      %372 = vmatpush1.msra.mxu0 0.0
      %373 = vmatprep.subr.mxu0 0.0
      %374 = vmatpush1.msra.mxu0 0.0
      %375 = vmatprep.subr.mxu0 0.0
      %376 = vmatpush1.msra.mxu0 0.0
      %377 = vmatprep.subr.mxu0 0.0
      %378 = vmatpush1.msra.mxu0 0.0
      %379 = vmatprep.subr.mxu0 0.0
      %380 = vmatpush1.msra.mxu0 0.0
      %381 = vmatprep.subr.mxu0 0.0
      %382 = vmatpush1.msra.mxu0 0.0
      %383 = vmatprep.mubr.f32.mxu0 0.0
      %384 = vmatmul.mubr.f32.gmra.mrb[0].mxu0 %v317
      %v385 = vpop.f32.mrb[0].mxu0
      %v386 = vadd.f32 0.0, %v385
      %v387 = vpop.f32.mrb[0].mxu0
      %388 = vdwg.mxu0
      %v389 = vadd.f32 %v303, %v386
      %vm390 = vcmask 1043456
      %v391 = vsel %vm390, %v389, 0.0
      %v392 = vrot.slane %v391, 4
      %v393 = vadd.f32 %v391, %v392
      %v394 = vrot.slane %v393, 2
      %v395 = vadd.f32 %v393, %v394
      %v396 = vrot.slane %v395, 1
      %v397 = vadd.f32 %v395, %v396
      %v398 = vmul.f32 %v389, %v389
      %v399 = vsel %vm390, %v398, 0.0
      %v400 = vrot.slane %v399, 4
      %v401 = vadd.f32 %v399, %v400
      %v402 = vrot.slane %v401, 2
      %v403 = vadd.f32 %v401, %v402
      %v404 = vrot.slane %v403, 1
      %v405 = vadd.f32 %v403, %v404
      %vm406 = vcmask 1040384
      %v407 = vsel %vm406, %v397, %v405
      %408 = vst [vmem:[%s138] sm:$0x3] %v407
      %p409 = scmp.lt.s32.totalorder %s13, 7
      %s410 = scalar_select %p409, %s13, 7
      %s411 = smul.addr %s410, 2
      %s412 = scalar_lea.vmem %s2, %s411
      // Predicated region
      $region29: #{conv_batchnorm_relu.2} parent=27 // pred_check
        %p413 = pneg %p78
      $region30: #{conv_batchnorm_relu.2} parent=27 // pred_check_branch
        %415 = sbr.rel (%p413) target = $region32
      $region31: #{conv_batchnorm_relu.2} parent=27 // pred_region
        _
      $region32: #{conv_batchnorm_relu.2} parent=27 // pred_fallthru
        _
    $region28: #{conv_batchnorm_relu.2} parent=5 // pred_fallthru
      _
    %p416 = scmp.le.s32.totalorder 2, %s8
    // Predicated region
    $region33: #{conv_batchnorm_relu.2} parent=5 // pred_check
      %p417 = pneg %p416
    $region34: #{conv_batchnorm_relu.2} parent=5 // pred_check_branch
      %419 = sbr.rel (%p417) target = $region36
    $region35: #{conv_batchnorm_relu.2} parent=5 // pred_region
      %s420 = ssub.s32 %s8, 2
      // Predicated region
      $region37: #{conv_batchnorm_relu.2} parent=35 // pred_check
        %p421 = pneg %p84
      $region38: #{conv_batchnorm_relu.2} parent=35 // pred_check_branch
        %423 = sbr.rel (%p421) target = $region40
      $region39: #{conv_batchnorm_relu.2} parent=35 // pred_region
        %p424 = scmp.lt.s32.totalorder %s14, 7
        %s425 = scalar_select %p424, %s14, 7
        %s426 = smul.addr %s425, 2
        %s427 = scalar_lea.vmem %s2, %s426
      $region40: #{conv_batchnorm_relu.2} parent=35 // pred_fallthru
        _
    $region36: #{conv_batchnorm_relu.2} parent=5 // pred_fallthru
      _
  $region6: #{conv_batchnorm_relu.2} parent=0 // loop_footer
    %s12 = sadd.s32 1, %s8
  $region7: #{conv_batchnorm_relu.2} parent=0 // loop_footer_branch
    %7 = sbr.rel target = $region3
  $region8: #{conv_batchnorm_relu.2} parent=0 // loop_exit
    _

// kernel: conv_batchnorm_relu.3
$region0: #{conv_batchnorm_relu.3}
  #allocation0 [shape = 'u32[]', space=smem, size = 0x4, offset = 0x4, fixed_abs, tag = 'smem constant byte address 0x4 - core index']
  #allocation1 [shape = 'u32[144,128]{1,0:T(1,128)}', space=vmem, size = 0x12000, scoped, tag = 'internal scratch']
  %s0 = inlined_call_operand.vmem [shape: f32[8,6,72], index: 0, kind: input, shape index: {}]
  %s1 = inlined_call_operand.vmem [shape: f32[3,72,128], index: 1, kind: input, shape index: {}]
  %s2 = inlined_call_operand.vmem [shape: f32[1,128], index: 2, kind: input, shape index: {}]
  %s3 = inlined_call_operand.vmem [shape: f32[1,128], index: 3, kind: input, shape index: {}]
  %s4 = inlined_call_operand.vmem [shape: f32[8,4,128], index: 4, kind: output, shape index: {}]
  %s5 = sld [smem:[#allocation0]]
  $region49: #{conv_batchnorm_relu.3} parent=0
    _
  %s7 = ssub.s32 1, %s5
  %s8 = scalar_select 0, %s7, %s5
  loop: start=0, step=1, limit=10
  $region2: #{conv_batchnorm_relu.3} parent=0 // loop_pre_header
    _
  $region3: #{conv_batchnorm_relu.3} parent=0 // loop_header
    %s10 = sphi 0, %s14
    %p11 = scmp.ge.s32.totalorder %s10, 10
    %s20 = sphi 0, %s22
    %s23 = sphi 0, %s20
    %s24 = sphi 0, %s23
    %s40 = sphi 0, %s24
    %s44 = sphi 0, %s44
    %s46 = sphi 0, %s44
    %s47 = sphi 0, %s46
    %s61 = sphi 0, %s47
    %s65 = sphi 0, %s65
    %s67 = sphi 0, %s65
    %s68 = sphi 0, %s67
    %s82 = sphi 0, %s68
    %s86 = sphi 0, %s86
    %s88 = sphi 0, %s86
    %s89 = sphi 0, %s88
    %s103 = sphi 0, %s89
    %s109 = sphi 0, %s111
    %s112 = sphi 0, %s109
    %s113 = sphi 0, %s112
    %s129 = sphi 0, %s113
  $region4: #{conv_batchnorm_relu.3} parent=0 // loop_header_branch
    %13 = sbr.rel (%p11) target = $region8
  $region5: #{conv_batchnorm_relu.3} parent=0 // loop_body
    %s15 = ssub.s32 %s10, 1
    %s16 = ssub.s32 %s10, 2
    %s17 = sadd.s32 %s10, 1
    %s18 = ssub.s32 %s10, %s17
    %p19 = scmp.eq.s32.totalorder %s18, 0
    %s21 = sadd.s32 %s20, 1
    %s22 = scalar_select %p19, %s20, %s21
    %p25 = pneg %p19
    %p26 = scmp.eq.s32.totalorder %s10, 7
    %p27 = por %p25, %p26
    %p28 = scmp.ne.s32.totalorder %s20, %s23
    %p29 = scmp.eq.s32.totalorder %s10, 0
    %p30 = por %p28, %p29
    %p31 = scmp.ne.s32.totalorder %s20, %s23
    %p32 = scmp.eq.s32.totalorder %s15, 7
    %p33 = por %p31, %p32
    %p34 = scmp.ne.s32.totalorder %s23, %s24
    %p35 = scmp.eq.s32.totalorder %s15, 0
    %p36 = por %p34, %p35
    %p37 = scmp.ne.s32.totalorder %s23, %s24
    %p38 = scmp.eq.s32.totalorder %s16, 7
    %p39 = por %p37, %p38
    %p41 = scmp.ne.s32.totalorder %s24, %s40
    %p42 = scmp.eq.s32.totalorder %s16, 0
    %p43 = por %p41, %p42
    %s45 = sadd.s32 %s44, 1
    %p48 = scmp.eq.s32.totalorder %s10, 7
    %p49 = scmp.ne.s32.totalorder %s44, %s46
    %p50 = scmp.eq.s32.totalorder %s10, 0
    %p51 = por %p49, %p50
    %p52 = scmp.ne.s32.totalorder %s44, %s46
    %p53 = scmp.eq.s32.totalorder %s15, 7
    %p54 = por %p52, %p53
    %p55 = scmp.ne.s32.totalorder %s46, %s47
    %p56 = scmp.eq.s32.totalorder %s15, 0
    %p57 = por %p55, %p56
    %p58 = scmp.ne.s32.totalorder %s46, %s47
    %p59 = scmp.eq.s32.totalorder %s16, 7
    %p60 = por %p58, %p59
    %p62 = scmp.ne.s32.totalorder %s47, %s61
    %p63 = scmp.eq.s32.totalorder %s16, 0
    %p64 = por %p62, %p63
    %s66 = sadd.s32 %s65, 1
    %p69 = scmp.eq.s32.totalorder %s10, 7
    %p70 = scmp.ne.s32.totalorder %s65, %s67
    %p71 = scmp.eq.s32.totalorder %s10, 0
    %p72 = por %p70, %p71
    %p73 = scmp.ne.s32.totalorder %s65, %s67
    %p74 = scmp.eq.s32.totalorder %s15, 7
    %p75 = por %p73, %p74
    %p76 = scmp.ne.s32.totalorder %s67, %s68
    %p77 = scmp.eq.s32.totalorder %s15, 0
    %p78 = por %p76, %p77
    %p79 = scmp.ne.s32.totalorder %s67, %s68
    %p80 = scmp.eq.s32.totalorder %s16, 7
    %p81 = por %p79, %p80
    %p83 = scmp.ne.s32.totalorder %s68, %s82
    %p84 = scmp.eq.s32.totalorder %s16, 0
    %p85 = por %p83, %p84
    %s87 = sadd.s32 %s86, 1
    %p90 = scmp.eq.s32.totalorder %s10, 7
    %p91 = scmp.ne.s32.totalorder %s86, %s88
    %p92 = scmp.eq.s32.totalorder %s10, 0
    %p93 = por %p91, %p92
    %p94 = scmp.ne.s32.totalorder %s86, %s88
    %p95 = scmp.eq.s32.totalorder %s15, 7
    %p96 = por %p94, %p95
    %p97 = scmp.ne.s32.totalorder %s88, %s89
    %p98 = scmp.eq.s32.totalorder %s15, 0
    %p99 = por %p97, %p98
    %p100 = scmp.ne.s32.totalorder %s88, %s89
    %p101 = scmp.eq.s32.totalorder %s16, 7
    %p102 = por %p100, %p101
    %p104 = scmp.ne.s32.totalorder %s89, %s103
    %p105 = scmp.eq.s32.totalorder %s16, 0
    %p106 = por %p104, %p105
    %s107 = ssub.s32 %s10, %s17
    %p108 = scmp.eq.s32.totalorder %s107, 0
    %s110 = sadd.s32 %s109, 1
    %s111 = scalar_select %p108, %s109, %s110
    %p114 = pneg %p108
    %p115 = scmp.eq.s32.totalorder %s10, 7
    %p116 = por %p114, %p115
    %p117 = scmp.ne.s32.totalorder %s109, %s112
    %p118 = scmp.eq.s32.totalorder %s10, 0
    %p119 = por %p117, %p118
    %p120 = scmp.ne.s32.totalorder %s109, %s112
    %p121 = scmp.eq.s32.totalorder %s15, 7
    %p122 = por %p120, %p121
    %p123 = scmp.ne.s32.totalorder %s112, %s113
    %p124 = scmp.eq.s32.totalorder %s15, 0
    %p125 = por %p123, %p124
    %p126 = scmp.ne.s32.totalorder %s112, %s113
    %p127 = scmp.eq.s32.totalorder %s16, 7
    %p128 = por %p126, %p127
    %p130 = scmp.ne.s32.totalorder %s113, %s129
    %p131 = scmp.eq.s32.totalorder %s16, 0
    %p132 = por %p130, %p131
    %p133 = scmp.le.s32.totalorder 1, %s10
    %p134 = scmp.lt.s32.totalorder %s10, 9
    %p135 = pnand %p133, %p134
    %p136 = pneg %p135
    // Predicated region
    $region9: #{conv_batchnorm_relu.3} parent=5 // pred_check
      _
    $region10: #{conv_batchnorm_relu.3} parent=5 // pred_check_branch
      %138 = sbr.rel (%p135) target = $region12
    $region11: #{conv_batchnorm_relu.3} parent=5 // pred_region
      %s139 = ssub.s32 %s10, 1
      // Predicated region
      $region13: #{conv_batchnorm_relu.3} parent=11 // pred_check
        %p140 = pneg %p57
      $region14: #{conv_batchnorm_relu.3} parent=11 // pred_check_branch
        %142 = sbr.rel (%p140) target = $region16
      $region15: #{conv_batchnorm_relu.3} parent=11 // pred_region
        _
      $region16: #{conv_batchnorm_relu.3} parent=11 // pred_fallthru
        _
      // Predicated region
      $region17: #{conv_batchnorm_relu.3} parent=11 // pred_check
        %p143 = pneg %p78
      $region18: #{conv_batchnorm_relu.3} parent=11 // pred_check_branch
        %145 = sbr.rel (%p143) target = $region20
      $region19: #{conv_batchnorm_relu.3} parent=11 // pred_region
        _
      $region20: #{conv_batchnorm_relu.3} parent=11 // pred_fallthru
        _
      // Predicated region
      $region21: #{conv_batchnorm_relu.3} parent=11 // pred_check
        %p146 = pneg %p99
      $region22: #{conv_batchnorm_relu.3} parent=11 // pred_check_branch
        %148 = sbr.rel (%p146) target = $region24
      $region23: #{conv_batchnorm_relu.3} parent=11 // pred_region
        _
      $region24: #{conv_batchnorm_relu.3} parent=11 // pred_fallthru
        _
    $region12: #{conv_batchnorm_relu.3} parent=5 // pred_fallthru
      _
    %p149 = scmp.lt.s32.totalorder %s10, 8
    // Predicated region
    $region25: #{conv_batchnorm_relu.3} parent=5 // pred_check
      %p150 = pneg %p149
    $region26: #{conv_batchnorm_relu.3} parent=5 // pred_check_branch
      %152 = sbr.rel (%p150) target = $region28
    $region27: #{conv_batchnorm_relu.3} parent=5 // pred_region
      // Predicated region
      $region29: #{conv_batchnorm_relu.3} parent=27 // pred_check
        %p153 = pneg %p30
      $region30: #{conv_batchnorm_relu.3} parent=27 // pred_check_branch
        %155 = sbr.rel (%p153) target = $region32
      $region31: #{conv_batchnorm_relu.3} parent=27 // pred_region
        %p156 = scmp.lt.s32.totalorder %s10, 7
        %s157 = scalar_select %p156, %s10, 7
        %s158 = smul.addr %s157, 8
        %s159 = scalar_lea.vmem %s0, %s158
      $region32: #{conv_batchnorm_relu.3} parent=27 // pred_fallthru
        _
    $region28: #{conv_batchnorm_relu.3} parent=5 // pred_fallthru
      _
    %p160 = scmp.le.s32.totalorder 1, %s10
    %p161 = scmp.lt.s32.totalorder %s10, 9
    %p162 = pnand %p160, %p161
    %p163 = pneg %p162
    // Predicated region
    $region33: #{conv_batchnorm_relu.3} parent=5 // pred_check
      _
    $region34: #{conv_batchnorm_relu.3} parent=5 // pred_check_branch
      %165 = sbr.rel (%p162) target = $region36
    $region35: #{conv_batchnorm_relu.3} parent=5 // pred_region
      %s166 = ssub.s32 %s10, 1
      %p167 = scmp.lt.s32.totalorder %s15, 7
      %s168 = scalar_select %p167, %s15, 7
      %s169 = smul.addr %s168, 8
      %s170 = scalar_lea.vmem %s0, %s169
      %p171 = pneg %p36
      %p172 = pneg %p33
      %p173 = pneg %p57
      %p174 = pneg %p54
      %p175 = pneg %p78
      %p176 = pneg %p75
      %p177 = pneg %p99
      %p178 = pneg %p96
      %p179 = pneg %p125
      %p180 = pneg %p122
      %p181 = scmp.lt.s32.totalorder %s15, 7
      %s182 = scalar_select %p181, %s15, 7
      %s183 = smul.addr %s182, 4
      %s184 = scalar_lea.vmem %s4, %s183
      %p185 = scmp.lt.s32.totalorder %s15, 7
      %s186 = scalar_select %p185, %s15, 7
      %s187 = smul.addr %s186, 8
      %s188 = scalar_lea.vmem %s0, %s187
      %p189 = scmp.lt.s32.totalorder %s15, 7
      %s190 = scalar_select %p189, %s15, 7
      %s191 = smul.addr %s190, 4
      %s192 = scalar_lea.vmem %s4, %s191
      %v193 = vld [vmem:[%s188] sm:$0x3f]
      %v194 = vld [vmem:[%s1] sm:$0xff]
      %v195 = vld [vmem:[%s1 + $0x8] sm:$0xff]
      %v196 = vld [vmem:[%s1 + $0x10] sm:$0xff]
      %v197 = vld [vmem:[%s1 + $0x18] sm:$0xff]
      %v198 = vld [vmem:[%s1 + $0x20] sm:$0xff]
      %v199 = vld [vmem:[%s1 + $0x28] sm:$0xff]
      %v200 = vld [vmem:[%s1 + $0x30] sm:$0xff]
      %v201 = vld [vmem:[%s1 + $0x38] sm:$0xff]
      %v202 = vld [vmem:[%s1 + $0x40] sm:$0xff]
      %s203 = scalar_lea.vmem %s1, 72
      %v204 = vld [vmem:[%s203] sm:$0xff]
      %v205 = vld [vmem:[%s203 + $0x8] sm:$0xff]
      %v206 = vld [vmem:[%s203 + $0x10] sm:$0xff]
      %v207 = vld [vmem:[%s203 + $0x18] sm:$0xff]
      %v208 = vld [vmem:[%s203 + $0x20] sm:$0xff]
      %v209 = vld [vmem:[%s203 + $0x28] sm:$0xff]
      %v210 = vld [vmem:[%s203 + $0x30] sm:$0xff]
      %v211 = vld [vmem:[%s203 + $0x38] sm:$0xff]
      %v212 = vld [vmem:[%s203 + $0x40] sm:$0xff]
      %v214 = vrot.slane %v193, 1
      %vm215 = vcmask 588800
      %v216 = vsel %vm215, %v214, 0
      %218 = vmatprep.subr.mxu0 0.0
      %219 = vmatpush1.msra.mxu0 %v204
      %220 = vmatprep.subr.mxu0 0.0
      %221 = vmatpush1.msra.mxu0 %v205
      %222 = vmatprep.subr.mxu0 0.0
      %223 = vmatpush1.msra.mxu0 %v206
      %224 = vmatprep.subr.mxu0 0.0
      %225 = vmatpush1.msra.mxu0 %v207
      %226 = vmatprep.subr.mxu0 0.0
      %227 = vmatpush1.msra.mxu0 %v208
      %228 = vmatprep.subr.mxu0 0.0
      %229 = vmatpush1.msra.mxu0 %v209
      %230 = vmatprep.subr.mxu0 0.0
      %231 = vmatpush1.msra.mxu0 %v210
      %232 = vmatprep.subr.mxu0 0.0
      %233 = vmatpush1.msra.mxu0 %v211
      %234 = vmatprep.subr.mxu0 0.0
      %235 = vmatpush1.msra.mxu0 %v212
      %236 = vmatprep.subr.mxu0 0.0
      %237 = vmatpush1.msra.mxu0 0.0
      %238 = vmatprep.subr.mxu0 0.0
      %239 = vmatpush1.msra.mxu0 0.0
      %240 = vmatprep.subr.mxu0 0.0
      %241 = vmatpush1.msra.mxu0 0.0
      %242 = vmatprep.subr.mxu0 0.0
      %243 = vmatpush1.msra.mxu0 0.0
      %244 = vmatprep.subr.mxu0 0.0
      %245 = vmatpush1.msra.mxu0 0.0
      %246 = vmatprep.subr.mxu0 0.0
      %247 = vmatpush1.msra.mxu0 0.0
      %248 = vmatprep.subr.mxu0 0.0
      %249 = vmatpush1.msra.mxu0 0.0
      %250 = vmatprep.subr.mxu0 0.0
      %251 = vmatpush1.msra.mxu0 0.0
      %252 = vmatprep.subr.mxu0 0.0
      %253 = vmatpush1.msra.mxu0 0.0
      %254 = vmatprep.subr.mxu0 0.0
      %255 = vmatpush1.msra.mxu0 0.0
      %256 = vmatprep.subr.mxu0 0.0
      %257 = vmatpush1.msra.mxu0 0.0
      %258 = vmatprep.subr.mxu0 0.0
      %259 = vmatpush1.msra.mxu0 0.0
      %260 = vmatprep.subr.mxu0 0.0
      %261 = vmatpush1.msra.mxu0 0.0
      %262 = vmatprep.subr.mxu0 0.0
      %263 = vmatpush1.msra.mxu0 0.0
      %264 = vmatprep.subr.mxu0 0.0
      %265 = vmatpush1.msra.mxu0 0.0
      %266 = vmatprep.subr.mxu0 0.0
      %267 = vmatpush1.msra.mxu0 0.0
      %268 = vmatprep.subr.mxu0 0.0
      %269 = vmatpush1.msra.mxu0 0.0
      %270 = vmatprep.subr.mxu0 0.0
      %271 = vmatpush1.msra.mxu0 0.0
      %272 = vmatprep.subr.mxu0 0.0
      %273 = vmatpush1.msra.mxu0 0.0
      %274 = vmatprep.subr.mxu0 0.0
      %275 = vmatpush1.msra.mxu0 0.0
      %276 = vmatprep.subr.mxu0 0.0
      %277 = vmatpush1.msra.mxu0 0.0
      %278 = vmatprep.subr.mxu0 0.0
      %279 = vmatpush1.msra.mxu0 0.0
      %280 = vmatprep.subr.mxu0 0.0
      %281 = vmatpush1.msra.mxu0 0.0
      %282 = vmatprep.mubr.f32.mxu0 0.0
      %283 = vmatmul.mubr.f32.gmra.mrb[0].mxu0 %v216
      %v284 = vpop.f32.mrb[0].mxu0
      %v285 = vadd.f32 0.0, %v284
      %v286 = vpop.f32.mrb[0].mxu0
      %287 = vdwg.mxu0
      %v288 = vsel %vm215, %v193, 0
      %290 = vmatprep.subr.mxu0 0.0
      %291 = vmatpush1.msra.mxu0 %v194
      %292 = vmatprep.subr.mxu0 0.0
      %293 = vmatpush1.msra.mxu0 %v195
      %294 = vmatprep.subr.mxu0 0.0
      %295 = vmatpush1.msra.mxu0 %v196
      %296 = vmatprep.subr.mxu0 0.0
      %297 = vmatpush1.msra.mxu0 %v197
      %298 = vmatprep.subr.mxu0 0.0
      %299 = vmatpush1.msra.mxu0 %v198
      %300 = vmatprep.subr.mxu0 0.0
      %301 = vmatpush1.msra.mxu0 %v199
      %302 = vmatprep.subr.mxu0 0.0
      %303 = vmatpush1.msra.mxu0 %v200
      %304 = vmatprep.subr.mxu0 0.0
      %305 = vmatpush1.msra.mxu0 %v201
      %306 = vmatprep.subr.mxu0 0.0
      %307 = vmatpush1.msra.mxu0 %v202
      %308 = vmatprep.subr.mxu0 0.0
      %309 = vmatpush1.msra.mxu0 0.0
      %310 = vmatprep.subr.mxu0 0.0
      %311 = vmatpush1.msra.mxu0 0.0
      %312 = vmatprep.subr.mxu0 0.0
      %313 = vmatpush1.msra.mxu0 0.0
      %314 = vmatprep.subr.mxu0 0.0
      %315 = vmatpush1.msra.mxu0 0.0
      %316 = vmatprep.subr.mxu0 0.0
      %317 = vmatpush1.msra.mxu0 0.0
      %318 = vmatprep.subr.mxu0 0.0
      %319 = vmatpush1.msra.mxu0 0.0
      %320 = vmatprep.subr.mxu0 0.0
      %321 = vmatpush1.msra.mxu0 0.0
      %322 = vmatprep.subr.mxu0 0.0
      %323 = vmatpush1.msra.mxu0 0.0
      %324 = vmatprep.subr.mxu0 0.0
      %325 = vmatpush1.msra.mxu0 0.0
      %326 = vmatprep.subr.mxu0 0.0
      %327 = vmatpush1.msra.mxu0 0.0
      %328 = vmatprep.subr.mxu0 0.0
      %329 = vmatpush1.msra.mxu0 0.0
      %330 = vmatprep.subr.mxu0 0.0
      %331 = vmatpush1.msra.mxu0 0.0
      %332 = vmatprep.subr.mxu0 0.0
      %333 = vmatpush1.msra.mxu0 0.0
      %334 = vmatprep.subr.mxu0 0.0
      %335 = vmatpush1.msra.mxu0 0.0
      %336 = vmatprep.subr.mxu0 0.0
      %337 = vmatpush1.msra.mxu0 0.0
      %338 = vmatprep.subr.mxu0 0.0
      %339 = vmatpush1.msra.mxu0 0.0
      %340 = vmatprep.subr.mxu0 0.0
      %341 = vmatpush1.msra.mxu0 0.0
      %342 = vmatprep.subr.mxu0 0.0
      %343 = vmatpush1.msra.mxu0 0.0
      %344 = vmatprep.subr.mxu0 0.0
      %345 = vmatpush1.msra.mxu0 0.0
      %346 = vmatprep.subr.mxu0 0.0
      %347 = vmatpush1.msra.mxu0 0.0
      %348 = vmatprep.subr.mxu0 0.0
      %349 = vmatpush1.msra.mxu0 0.0
      %350 = vmatprep.subr.mxu0 0.0
      %351 = vmatpush1.msra.mxu0 0.0
      %352 = vmatprep.subr.mxu0 0.0
      %353 = vmatpush1.msra.mxu0 0.0
      %354 = vmatprep.mubr.f32.mxu0 0.0
      %355 = vmatmul.mubr.f32.gmra.mrb[0].mxu0 %v288
      %v356 = vpop.f32.mrb[0].mxu0
      %v357 = vadd.f32 %v285, %v356
      %v358 = vpop.f32.mrb[0].mxu0
      %359 = vdwg.mxu0
      %s360 = scalar_lea.vmem %s1, 144
      %v361 = vld [vmem:[%s360] sm:$0xff]
      %v362 = vld [vmem:[%s360 + $0x8] sm:$0xff]
      %v363 = vld [vmem:[%s360 + $0x10] sm:$0xff]
      %v364 = vld [vmem:[%s360 + $0x18] sm:$0xff]
      %v365 = vld [vmem:[%s360 + $0x20] sm:$0xff]
      %v366 = vld [vmem:[%s360 + $0x28] sm:$0xff]
      %v367 = vld [vmem:[%s360 + $0x30] sm:$0xff]
      %v368 = vld [vmem:[%s360 + $0x38] sm:$0xff]
      %v369 = vld [vmem:[%s360 + $0x40] sm:$0xff]
      %v370 = vrot.slane %v193, 2
      %v371 = vsel %vm215, %v370, 0
      %373 = vmatprep.subr.mxu0 0.0
      %374 = vmatpush1.msra.mxu0 %v361
      %375 = vmatprep.subr.mxu0 0.0
      %376 = vmatpush1.msra.mxu0 %v362
      %377 = vmatprep.subr.mxu0 0.0
      %378 = vmatpush1.msra.mxu0 %v363
      %379 = vmatprep.subr.mxu0 0.0
      %380 = vmatpush1.msra.mxu0 %v364
      %381 = vmatprep.subr.mxu0 0.0
      %382 = vmatpush1.msra.mxu0 %v365
      %383 = vmatprep.subr.mxu0 0.0
      %384 = vmatpush1.msra.mxu0 %v366
      %385 = vmatprep.subr.mxu0 0.0
      %386 = vmatpush1.msra.mxu0 %v367
      %387 = vmatprep.subr.mxu0 0.0
      %388 = vmatpush1.msra.mxu0 %v368
      %389 = vmatprep.subr.mxu0 0.0
      %390 = vmatpush1.msra.mxu0 %v369
      %391 = vmatprep.subr.mxu0 0.0
      %392 = vmatpush1.msra.mxu0 0.0
      %393 = vmatprep.subr.mxu0 0.0
      %394 = vmatpush1.msra.mxu0 0.0
      %395 = vmatprep.subr.mxu0 0.0
      %396 = vmatpush1.msra.mxu0 0.0
      %397 = vmatprep.subr.mxu0 0.0
      %398 = vmatpush1.msra.mxu0 0.0
      %399 = vmatprep.subr.mxu0 0.0
      %400 = vmatpush1.msra.mxu0 0.0
      %401 = vmatprep.subr.mxu0 0.0
      %402 = vmatpush1.msra.mxu0 0.0
      %403 = vmatprep.subr.mxu0 0.0
      %404 = vmatpush1.msra.mxu0 0.0
      %405 = vmatprep.subr.mxu0 0.0
      %406 = vmatpush1.msra.mxu0 0.0
      %407 = vmatprep.subr.mxu0 0.0
      %408 = vmatpush1.msra.mxu0 0.0
      %409 = vmatprep.subr.mxu0 0.0
      %410 = vmatpush1.msra.mxu0 0.0
      %411 = vmatprep.subr.mxu0 0.0
      %412 = vmatpush1.msra.mxu0 0.0
      %413 = vmatprep.subr.mxu0 0.0
      %414 = vmatpush1.msra.mxu0 0.0
      %415 = vmatprep.subr.mxu0 0.0
      %416 = vmatpush1.msra.mxu0 0.0
      %417 = vmatprep.subr.mxu0 0.0
      %418 = vmatpush1.msra.mxu0 0.0
      %419 = vmatprep.subr.mxu0 0.0
      %420 = vmatpush1.msra.mxu0 0.0
      %421 = vmatprep.subr.mxu0 0.0
      %422 = vmatpush1.msra.mxu0 0.0
      %423 = vmatprep.subr.mxu0 0.0
      %424 = vmatpush1.msra.mxu0 0.0
      %425 = vmatprep.subr.mxu0 0.0
      %426 = vmatpush1.msra.mxu0 0.0
      %427 = vmatprep.subr.mxu0 0.0
      %428 = vmatpush1.msra.mxu0 0.0
      %429 = vmatprep.subr.mxu0 0.0
      %430 = vmatpush1.msra.mxu0 0.0
      %431 = vmatprep.subr.mxu0 0.0
      %432 = vmatpush1.msra.mxu0 0.0
      %433 = vmatprep.subr.mxu0 0.0
      %434 = vmatpush1.msra.mxu0 0.0
      %435 = vmatprep.subr.mxu0 0.0
      %436 = vmatpush1.msra.mxu0 0.0
      %437 = vmatprep.mubr.f32.mxu0 0.0
      %438 = vmatmul.mubr.f32.gmra.mrb[0].mxu0 %v371
      %v439 = vpop.f32.mrb[0].mxu0
      %v440 = vadd.f32 0.0, %v439
      %v441 = vpop.f32.mrb[0].mxu0
      %442 = vdwg.mxu0
      %v443 = vadd.f32 %v357, %v440
      %v444 = vld [vmem:[%s2] sm:$0x1]
      %v446 = vlaneseq
      %v447 = vshrl.u32 %v446, 7
      %v448 = vsub.s32 0, %v447
      %v449 = vrot.slane %v444, %v448
      %v451 = vmul.f32 %v443, %v449
      %v452 = vld [vmem:[%s3] sm:$0x1]
      %v454 = vlaneseq
      %v455 = vshrl.u32 %v454, 7
      %v456 = vsub.s32 0, %v455
      %v457 = vrot.slane %v452, %v456
      %v459 = vadd.f32 %v451, %v457
      %v460 = vmax.f32 %v459, 0.0
      %461 = vst [vmem:[%s192] sm:$0xf] %v460
      %p462 = scmp.lt.s32.totalorder %s15, 7
      %s463 = scalar_select %p462, %s15, 7
      %s464 = smul.addr %s463, 4
      %s465 = scalar_lea.vmem %s4, %s464
      // Predicated region
      $region37: #{conv_batchnorm_relu.3} parent=35 // pred_check
        %p466 = pneg %p122
      $region38: #{conv_batchnorm_relu.3} parent=35 // pred_check_branch
        %468 = sbr.rel (%p466) target = $region40
      $region39: #{conv_batchnorm_relu.3} parent=35 // pred_region
        _
      $region40: #{conv_batchnorm_relu.3} parent=35 // pred_fallthru
        _
    $region36: #{conv_batchnorm_relu.3} parent=5 // pred_fallthru
      _
    %p469 = scmp.le.s32.totalorder 2, %s10
    // Predicated region
    $region41: #{conv_batchnorm_relu.3} parent=5 // pred_check
      %p470 = pneg %p469
    $region42: #{conv_batchnorm_relu.3} parent=5 // pred_check_branch
      %472 = sbr.rel (%p470) target = $region44
    $region43: #{conv_batchnorm_relu.3} parent=5 // pred_region
      %s473 = ssub.s32 %s10, 2
      // Predicated region
      $region45: #{conv_batchnorm_relu.3} parent=43 // pred_check
        %p474 = pneg %p128
      $region46: #{conv_batchnorm_relu.3} parent=43 // pred_check_branch
        %476 = sbr.rel (%p474) target = $region48
      $region47: #{conv_batchnorm_relu.3} parent=43 // pred_region
        %p477 = scmp.lt.s32.totalorder %s16, 7
        %s478 = scalar_select %p477, %s16, 7
        %s479 = smul.addr %s478, 4
        %s480 = scalar_lea.vmem %s4, %s479
      $region48: #{conv_batchnorm_relu.3} parent=43 // pred_fallthru
        _
    $region44: #{conv_batchnorm_relu.3} parent=5 // pred_fallthru
      _
  $region6: #{conv_batchnorm_relu.3} parent=0 // loop_footer
    %s14 = sadd.s32 1, %s10
  $region7: #{conv_batchnorm_relu.3} parent=0 // loop_footer_branch
    %9 = sbr.rel target = $region3
  $region8: #{conv_batchnorm_relu.3} parent=0 // loop_exit
    _

</llo_original>
